<compile_context>
chip_gen: v7x
topology: tpu7x:2x2x1
jax: 0.10.0
libtpu: 0.0.40
codegen_flags: <defaults>
</compile_context>

<pallas_src>
import jax
import jax.numpy as jnp
from jax import lax
from jax.experimental import pallas as pl
from jax.experimental.pallas import tpu as pltpu


def _dis_embed_att_kernel(x_ref, w1_ref, b1_ref, w2_ref, b2_ref, out_ref):
    tb = x_ref.shape[0]

    # ---- fc1 on the MXU: (tb, D) @ (D, H) -> (tb, H), f32 accumulation ----
    h = jnp.dot(x_ref[...], w1_ref[...], preferred_element_type=jnp.float32)
    h = h + b1_ref[...]                                   # (1, H) broadcast
    # LeakyReLU(0.2): equivalent to where(h>=0, h, 0.2h) since slope > 0.
    h = jnp.maximum(h, 0.2 * h)

    # ---- fc2 on the VPU/XLU: per-row dot with w2 (avoids an N=1 matmul) ----
    o_col = jnp.sum(h * w2_ref[...], axis=-1, keepdims=True)     # (tb, 1)
    o_col = o_col + b2_ref[0]                                     # SMEM scalar

    # ---- lane-dense store: convert the (tb,1) column into (1,tb) rows ------
    # 128 rows at a time: broadcast the column across lanes, keep only the
    # diagonal, sublane-reduce.  row[0, j] = col[j, 0].
    chunk = 128 if tb % 128 == 0 else tb
    eye = (lax.broadcasted_iota(jnp.int32, (chunk, chunk), 0) ==
           lax.broadcasted_iota(jnp.int32, (chunk, chunk), 1)
           ).astype(jnp.float32)
    for c in range(tb // chunk):                          # static, fully unrolled
        col = o_col[c * chunk:(c + 1) * chunk, :]                 # (chunk, 1)
        row = jnp.sum(col * eye, axis=0, keepdims=True)           # (1, chunk)
        out_ref[:, c * chunk:(c + 1) * chunk] = row.astype(out_ref.dtype)


def _pick_tb(batch):
    """Largest tile in {512,256,128} dividing B with >= 2 grid steps."""
    if batch % 128 == 0:
        for cand in (512, 256, 128):
            if batch % cand == 0 and batch // cand >= 2:
                return cand
    return batch          # small / irregular batch: single full-batch tile


def dis_embed_att(x, w1, b1, w2, b2, *, tb=None):
    """Forward pass of Dis_Embed_Att.

    x:  (B, D)   D = embedSize + attSize   (f32; bf16 OK at large B)
    w1: (D, H)   = fc1.weight.T            (same dtype as x)
    b1: (H,)     = fc1.bias
    w2: (H,1)|(H,) = fc2.weight (transposed / flattened)
    b2: (1,)|()  = fc2.bias
    Returns (B, 1) f32.
    """
    B, D = x.shape
    H = w1.shape[1]
    if tb is None:
        tb = _pick_tb(B)

    # Guard block-shape constraints (8,128) + lane-dense output blocks.
    assert B % tb == 0, f"batch {B} must be divisible by tile {tb}"
    assert tb == B or tb % 128 == 0, (
        f"tb={tb} must be a multiple of 128, or equal to the full batch")

    b1_row = b1.reshape(1, H).astype(jnp.float32)
    w2_row = jnp.asarray(w2).reshape(1, H).astype(jnp.float32)
    b2_s = jnp.asarray(b2, dtype=jnp.float32).reshape(1)

    grid = (B // tb,)
    out = pl.pallas_call(
        _dis_embed_att_kernel,
        out_shape=jax.ShapeDtypeStruct((1, B), jnp.float32),
        grid_spec=pltpu.PrefetchScalarGridSpec(
            num_scalar_prefetch=0,
            grid=grid,
            in_specs=[
                pl.BlockSpec((tb, D), lambda i: (i, 0)),          # x tile (pipelined)
                pl.BlockSpec((D, H), lambda i: (0, 0)),           # W1 (resident)
                pl.BlockSpec((1, H), lambda i: (0, 0)),           # b1 (resident)
                pl.BlockSpec((1, H), lambda i: (0, 0)),           # w2 row (resident)
                pl.BlockSpec(memory_space=pltpu.MemorySpace.SMEM),  # b2 scalar
            ],
            out_specs=pl.BlockSpec((1, tb), lambda i: (0, i)),    # lane-dense
        ),
        compiler_params=pltpu.CompilerParams(
            dimension_semantics=("parallel",),    # shard batch tiles across TCs (v7x)
        ),
    )(x, w1, b1_row, w2_row, b2_s)
    return out.reshape(B, 1)


def reference(x, w1, b1, w2, b2):
    h = x.astype(jnp.float32) @ w1.astype(jnp.float32) + b1
    h = jnp.where(h >= 0, h, 0.2 * h)
    return h @ jnp.asarray(w2).reshape(-1, 1) + jnp.asarray(b2).reshape(1, 1)


if __name__ == "__main__":
    # opt-like hyperparameters (small, consistent with the module)
    embedSize, attSize, nhF = 16, 16, 64
    D = embedSize + attSize

    key = jax.random.PRNGKey(0)
    kw1, kw2, kb1, kb2, kx = jax.random.split(key, 5)

    # weights_init-style Linear weights ~ N(0, 0.02); small nonzero biases so
    # the bias code paths are actually exercised.
    w1 = 0.02 * jax.random.normal(kw1, (D, nhF), dtype=jnp.float32)   # fc1.weight.T
    b1 = 0.01 * jax.random.normal(kb1, (nhF,), dtype=jnp.float32)
    w2 = 0.02 * jax.random.normal(kw2, (nhF, 1), dtype=jnp.float32)   # fc2.weight.T
    b2 = 0.01 * jax.random.normal(kb2, (1,), dtype=jnp.float32)

    # multi-tile pipelined path / single odd tile / tiny tile
    for batch in (512, 64, 8):
        x = jax.random.normal(jax.random.fold_in(kx, batch), (batch, D),
                              dtype=jnp.float32)
        out = jax.block_until_ready(dis_embed_att(x, w1, b1, w2, b2))
        ref = reference(x, w1, b1, w2, b2)
        assert out.shape == (batch, 1)
        assert jnp.allclose(out, ref, atol=2e-5, rtol=1e-3), (
            f"mismatch at batch={batch}: max err {jnp.max(jnp.abs(out - ref))}")

    print("KERNEL_OK")
</pallas_src>

<mosaic_0001>
module attributes {stable_mosaic.version = 11 : i64} {
  func.func @_dis_embed_att_kernel(%arg0: i32, %arg1: memref<256x32xf32, #tpu.memory_space<vmem>>, %arg2: memref<32x64xf32, #tpu.memory_space<vmem>>, %arg3: memref<1x64xf32, #tpu.memory_space<vmem>>, %arg4: memref<1x64xf32, #tpu.memory_space<vmem>>, %arg5: memref<1xf32, #tpu.memory_space<smem>>, %arg6: memref<1x256xf32, #tpu.memory_space<vmem>>) attributes {dimension_semantics = [#tpu.dimension_semantics<parallel>], iteration_bounds = array<i64: 2>, scalar_prefetch = 0 : i64, scratch_operands = 0 : i64, tpu.core_type = #tpu.core_type<tc>, window_params = [{transform_indices = @transform_0, window_bounds = array<i64: 256, 32>}, {pipeline_mode = #tpu.pipeline_mode<synchronous>, transform_indices = @transform_1, window_bounds = array<i64: 32, 64>}, {pipeline_mode = #tpu.pipeline_mode<synchronous>, transform_indices = @transform_2, window_bounds = array<i64: 1, 64>}, {pipeline_mode = #tpu.pipeline_mode<synchronous>, transform_indices = @transform_3, window_bounds = array<i64: 1, 64>}, {transform_indices = @transform_4, window_bounds = array<i64: 1>}, {transform_indices = @transform_5, window_bounds = array<i64: 1, 256>}]} {
    %c0 = arith.constant 0 : index
    %c0_0 = arith.constant 0 : index
    %0 = vector.load %arg1[%c0, %c0_0] : memref<256x32xf32, #tpu.memory_space<vmem>>, vector<256x32xf32>
    %c0_1 = arith.constant 0 : index
    %c0_2 = arith.constant 0 : index
    %1 = vector.load %arg2[%c0_1, %c0_2] : memref<32x64xf32, #tpu.memory_space<vmem>>, vector<32x64xf32>
    %cst = arith.constant dense<0.000000e+00> : vector<256x64xf32>
    %2 = tpu.matmul %0, %1, %cst {dimension_numbers = #tpu.dot_dimension_numbers<[1], [0], [0], [1], [0, 0, 1, 1], [], []>} : vector<256x32xf32>, vector<32x64xf32>, vector<256x64xf32> -> vector<256x64xf32>
    %c0_3 = arith.constant 0 : index
    %c0_4 = arith.constant 0 : index
    %3 = vector.load %arg3[%c0_3, %c0_4] : memref<1x64xf32, #tpu.memory_space<vmem>>, vector<1x64xf32>
    %4 = vector.broadcast %3 : vector<1x64xf32> to vector<256x64xf32>
    %5 = arith.addf %2, %4 : vector<256x64xf32>
    %cst_5 = arith.constant 2.000000e-01 : f32
    %6 = vector.broadcast %cst_5 : f32 to vector<256x64xf32>
    %7 = arith.mulf %6, %5 : vector<256x64xf32>
    %8 = arith.maximumf %5, %7 : vector<256x64xf32>
    %c0_6 = arith.constant 0 : index
    %c0_7 = arith.constant 0 : index
    %9 = vector.load %arg4[%c0_6, %c0_7] : memref<1x64xf32, #tpu.memory_space<vmem>>, vector<1x64xf32>
    %10 = vector.broadcast %9 : vector<1x64xf32> to vector<256x64xf32>
    %11 = arith.mulf %8, %10 : vector<256x64xf32>
    %cst_8 = arith.constant dense<0.000000e+00> : vector<256xf32>
    %12 = vector.multi_reduction <add>, %11, %cst_8 [1] : vector<256x64xf32> to vector<256xf32>
    %13 = vector.shape_cast %12 : vector<256xf32> to vector<256x1xf32>
    %c0_9 = arith.constant 0 : index
    %14 = memref.load %arg5[%c0_9] : memref<1xf32, #tpu.memory_space<smem>>
    %15 = vector.broadcast %14 : f32 to vector<256x1xf32>
    %16 = arith.addf %13, %15 : vector<256x1xf32>
    %17 = tpu.iota {dimensions = array<i32: 0>} : vector<128x128xi32>
    %18 = tpu.iota {dimensions = array<i32: 1>} : vector<128x128xi32>
    %19 = arith.cmpi eq, %17, %18 : vector<128x128xi32>
    %20 = arith.extui %19 : vector<128x128xi1> to vector<128x128xi32>
    %21 = arith.sitofp %20 : vector<128x128xi32> to vector<128x128xf32>
    %22 = vector.extract_strided_slice %16 {offsets = [0, 0], sizes = [128, 1], strides = [1, 1]} : vector<256x1xf32> to vector<128x1xf32>
    %23 = vector.broadcast %22 : vector<128x1xf32> to vector<128x128xf32>
    %24 = arith.mulf %23, %21 : vector<128x128xf32>
    %cst_10 = arith.constant dense<0.000000e+00> : vector<128xf32>
    %25 = vector.multi_reduction <add>, %24, %cst_10 [0] : vector<128x128xf32> to vector<128xf32>
    %26 = vector.shape_cast %25 : vector<128xf32> to vector<1x128xf32>
    %c0_11 = arith.constant 0 : index
    %c0_12 = arith.constant 0 : index
    %27 = vector.load %arg6[%c0_11, %c0_12] : memref<1x256xf32, #tpu.memory_space<vmem>>, vector<1x128xf32>
    tpu.vector_store %arg6[%c0_11, %c0_12], %26 {strides = array<i32>} : memref<1x256xf32, #tpu.memory_space<vmem>>, vector<1x128xf32>,
    %28 = vector.extract_strided_slice %16 {offsets = [128, 0], sizes = [128, 1], strides = [1, 1]} : vector<256x1xf32> to vector<128x1xf32>
    %29 = vector.broadcast %28 : vector<128x1xf32> to vector<128x128xf32>
    %30 = arith.mulf %29, %21 : vector<128x128xf32>
    %cst_13 = arith.constant dense<0.000000e+00> : vector<128xf32>
    %31 = vector.multi_reduction <add>, %30, %cst_13 [0] : vector<128x128xf32> to vector<128xf32>
    %32 = vector.shape_cast %31 : vector<128xf32> to vector<1x128xf32>
    %c0_14 = arith.constant 0 : index
    %c128 = arith.constant 128 : index
    %33 = vector.load %arg6[%c0_14, %c128] : memref<1x256xf32, #tpu.memory_space<vmem>>, vector<1x128xf32>
    tpu.vector_store %arg6[%c0_14, %c128], %32 {strides = array<i32>} : memref<1x256xf32, #tpu.memory_space<vmem>>, vector<1x128xf32>,
    return
  }
  func.func @transform_0(%arg0: i32) -> (i32, i32) {
    %c0_i32 = arith.constant 0 : i32
    %c0_i32_0 = arith.constant 0 : i32
    return %arg0, %c0_i32 : i32, i32
  }
  func.func @transform_1(%arg0: i32) -> (i32, i32) {
    %c0_i32 = arith.constant 0 : i32
    %c0_i32_0 = arith.constant 0 : i32
    %c0_i32_1 = arith.constant 0 : i32
    return %c0_i32, %c0_i32_0 : i32, i32
  }
  func.func @transform_2(%arg0: i32) -> (i32, i32) {
    %c0_i32 = arith.constant 0 : i32
    %c0_i32_0 = arith.constant 0 : i32
    %c0_i32_1 = arith.constant 0 : i32
    return %c0_i32, %c0_i32_0 : i32, i32
  }
  func.func @transform_3(%arg0: i32) -> (i32, i32) {
    %c0_i32 = arith.constant 0 : i32
    %c0_i32_0 = arith.constant 0 : i32
    %c0_i32_1 = arith.constant 0 : i32
    return %c0_i32, %c0_i32_0 : i32, i32
  }
  func.func @transform_4(%arg0: i32) -> i32 {
    %c0_i32 = arith.constant 0 : i32
    %c0_i32_0 = arith.constant 0 : i32
    return %c0_i32 : i32
  }
  func.func @transform_5(%arg0: i32) -> (i32, i32) {
    %c0_i32 = arith.constant 0 : i32
    %c0_i32_0 = arith.constant 0 : i32
    return %c0_i32, %arg0 : i32, i32
  }
}

</mosaic_0001>

<llo_original>
// kernel: tpu_custom_call.1
$region0: #{tpu_custom_call.1}
  #allocation0 [shape = 'u32[]', space=smem, size = 0x4, offset = 0x4, fixed_abs, tag = 'smem constant byte address 0x4 - core index']
  #allocation1 [shape = 'u32[144,128]{1,0:T(1,128)}', space=vmem, size = 0x12000, scoped, tag = 'internal scratch']
  #allocation2 [shape = 'f32[1]{0:T(128)S(6)}', space=smem, size = 0x200, scoped, tag = 'scoped memory for tpu_custom_call.1']
  %s0 = inlined_call_operand.vmem [shape: f32[512,32], index: 0, kind: input, shape index: {}]
  %s1 = inlined_call_operand.vmem [shape: f32[32,64], index: 1, kind: input, shape index: {}]
  %s2 = inlined_call_operand.vmem [shape: f32[1,64], index: 2, kind: input, shape index: {}]
  %s3 = inlined_call_operand.vmem [shape: f32[1,64], index: 3, kind: input, shape index: {}]
  %s4 = inlined_call_operand.<no memory space> [shape: f32[1], index: 4, kind: input, shape index: {}]
  %s5 = inlined_call_operand.hbm [shape: f32[1,512], index: 5, kind: output, shape index: {}]
  %s6 = sld [smem:[#allocation0]]
  $region53: #{tpu_custom_call.1} parent=0
    _
  %s8 = ssub.s32 1, %s6
  %s9 = scalar_select 0, %s8, %s6
  %10 = sst [smem:[#allocation2]] %s4
  $region1: #{tpu_custom_call.1} parent=0
    #allocation3 [shape = 'u8[2048]{0}', space=vmem, size = 0x800, scoped, tag = 'output window, operand 0']
    #allocation4 [shape = 's32[2]{0}', space=sflag, size = 0x8, scoped, tag = 'scoped memory for tpu_custom_call.1']
    %11 = vsyncpa [#allocation4], 0
    %s12 = scalar_lea.sflag [#allocation4], 1
    %13 = vsyncpa %s12, 0
    loop: start=0, step=1, limit=4
    $region2: #{tpu_custom_call.1} parent=1 // loop_pre_header
      _
    $region3: #{tpu_custom_call.1} parent=1 // loop_header
      %s15 = sphi 0, %s19
      %p16 = scmp.ge.s32.totalorder %s15, 4
      %s25 = sphi 0, %s27
      %s28 = sphi 0, %s25
      %s29 = sphi 0, %s28
      %s45 = sphi 0, %s29
      %s49 = sphi 0, %s49
      %s51 = sphi 0, %s49
      %s52 = sphi 0, %s51
      %s66 = sphi 0, %s52
      %s70 = sphi 0, %s70
      %s72 = sphi 0, %s70
      %s73 = sphi 0, %s72
      %s87 = sphi 0, %s73
      %s91 = sphi 0, %s91
      %s93 = sphi 0, %s91
      %s94 = sphi 0, %s93
      %s108 = sphi 0, %s94
      %s112 = sphi 0, %s112
      %s114 = sphi 0, %s112
      %s115 = sphi 0, %s114
      %s129 = sphi 0, %s115
      %s135 = sphi 0, %s137
      %s138 = sphi 0, %s135
      %s139 = sphi 0, %s138
      %s155 = sphi 0, %s139
    $region4: #{tpu_custom_call.1} parent=1 // loop_header_branch
      %18 = sbr.rel (%p16) target = $region8
    $region5: #{tpu_custom_call.1} parent=1 // loop_body
      %s20 = ssub.s32 %s15, 1
      %s21 = ssub.s32 %s15, 2
      %s22 = sadd.s32 %s15, 1
      %s23 = ssub.s32 %s15, %s22
      %p24 = scmp.eq.s32.totalorder %s23, 0
      %s26 = sadd.s32 %s25, 1
      %s27 = scalar_select %p24, %s25, %s26
      %p30 = pneg %p24
      %p31 = scmp.eq.s32.totalorder %s15, 1
      %p32 = por %p30, %p31
      %p33 = scmp.ne.s32.totalorder %s25, %s28
      %p34 = scmp.eq.s32.totalorder %s15, 0
      %p35 = por %p33, %p34
      %p36 = scmp.ne.s32.totalorder %s25, %s28
      %p37 = scmp.eq.s32.totalorder %s20, 1
      %p38 = por %p36, %p37
      %p39 = scmp.ne.s32.totalorder %s28, %s29
      %p40 = scmp.eq.s32.totalorder %s20, 0
      %p41 = por %p39, %p40
      %p42 = scmp.ne.s32.totalorder %s28, %s29
      %p43 = scmp.eq.s32.totalorder %s21, 1
      %p44 = por %p42, %p43
      %p46 = scmp.ne.s32.totalorder %s29, %s45
      %p47 = scmp.eq.s32.totalorder %s21, 0
      %p48 = por %p46, %p47
      %s50 = sadd.s32 %s49, 1
      %p53 = scmp.eq.s32.totalorder %s15, 1
      %p54 = scmp.ne.s32.totalorder %s49, %s51
      %p55 = scmp.eq.s32.totalorder %s15, 0
      %p56 = por %p54, %p55
      %p57 = scmp.ne.s32.totalorder %s49, %s51
      %p58 = scmp.eq.s32.totalorder %s20, 1
      %p59 = por %p57, %p58
      %p60 = scmp.ne.s32.totalorder %s51, %s52
      %p61 = scmp.eq.s32.totalorder %s20, 0
      %p62 = por %p60, %p61
      %p63 = scmp.ne.s32.totalorder %s51, %s52
      %p64 = scmp.eq.s32.totalorder %s21, 1
      %p65 = por %p63, %p64
      %p67 = scmp.ne.s32.totalorder %s52, %s66
      %p68 = scmp.eq.s32.totalorder %s21, 0
      %p69 = por %p67, %p68
      %s71 = sadd.s32 %s70, 1
      %p74 = scmp.eq.s32.totalorder %s15, 1
      %p75 = scmp.ne.s32.totalorder %s70, %s72
      %p76 = scmp.eq.s32.totalorder %s15, 0
      %p77 = por %p75, %p76
      %p78 = scmp.ne.s32.totalorder %s70, %s72
      %p79 = scmp.eq.s32.totalorder %s20, 1
      %p80 = por %p78, %p79
      %p81 = scmp.ne.s32.totalorder %s72, %s73
      %p82 = scmp.eq.s32.totalorder %s20, 0
      %p83 = por %p81, %p82
      %p84 = scmp.ne.s32.totalorder %s72, %s73
      %p85 = scmp.eq.s32.totalorder %s21, 1
      %p86 = por %p84, %p85
      %p88 = scmp.ne.s32.totalorder %s73, %s87
      %p89 = scmp.eq.s32.totalorder %s21, 0
      %p90 = por %p88, %p89
      %s92 = sadd.s32 %s91, 1
      %p95 = scmp.eq.s32.totalorder %s15, 1
      %p96 = scmp.ne.s32.totalorder %s91, %s93
      %p97 = scmp.eq.s32.totalorder %s15, 0
      %p98 = por %p96, %p97
      %p99 = scmp.ne.s32.totalorder %s91, %s93
      %p100 = scmp.eq.s32.totalorder %s20, 1
      %p101 = por %p99, %p100
      %p102 = scmp.ne.s32.totalorder %s93, %s94
      %p103 = scmp.eq.s32.totalorder %s20, 0
      %p104 = por %p102, %p103
      %p105 = scmp.ne.s32.totalorder %s93, %s94
      %p106 = scmp.eq.s32.totalorder %s21, 1
      %p107 = por %p105, %p106
      %p109 = scmp.ne.s32.totalorder %s94, %s108
      %p110 = scmp.eq.s32.totalorder %s21, 0
      %p111 = por %p109, %p110
      %s113 = sadd.s32 %s112, 1
      %p116 = scmp.eq.s32.totalorder %s15, 1
      %p117 = scmp.ne.s32.totalorder %s112, %s114
      %p118 = scmp.eq.s32.totalorder %s15, 0
      %p119 = por %p117, %p118
      %p120 = scmp.ne.s32.totalorder %s112, %s114
      %p121 = scmp.eq.s32.totalorder %s20, 1
      %p122 = por %p120, %p121
      %p123 = scmp.ne.s32.totalorder %s114, %s115
      %p124 = scmp.eq.s32.totalorder %s20, 0
      %p125 = por %p123, %p124
      %p126 = scmp.ne.s32.totalorder %s114, %s115
      %p127 = scmp.eq.s32.totalorder %s21, 1
      %p128 = por %p126, %p127
      %p130 = scmp.ne.s32.totalorder %s115, %s129
      %p131 = scmp.eq.s32.totalorder %s21, 0
      %p132 = por %p130, %p131
      %s133 = ssub.s32 %s15, %s22
      %p134 = scmp.eq.s32.totalorder %s133, 0
      %s136 = sadd.s32 %s135, 1
      %s137 = scalar_select %p134, %s135, %s136
      %p140 = pneg %p134
      %p141 = scmp.eq.s32.totalorder %s15, 1
      %p142 = por %p140, %p141
      %p143 = scmp.ne.s32.totalorder %s135, %s138
      %p144 = scmp.eq.s32.totalorder %s15, 0
      %p145 = por %p143, %p144
      %p146 = scmp.ne.s32.totalorder %s135, %s138
      %p147 = scmp.eq.s32.totalorder %s20, 1
      %p148 = por %p146, %p147
      %p149 = scmp.ne.s32.totalorder %s138, %s139
      %p150 = scmp.eq.s32.totalorder %s20, 0
      %p151 = por %p149, %p150
      %p152 = scmp.ne.s32.totalorder %s138, %s139
      %p153 = scmp.eq.s32.totalorder %s21, 1
      %p154 = por %p152, %p153
      %p156 = scmp.ne.s32.totalorder %s139, %s155
      %p157 = scmp.eq.s32.totalorder %s21, 0
      %p158 = por %p156, %p157
      %p159 = scmp.le.s32.totalorder 1, %s15
      %p160 = scmp.lt.s32.totalorder %s15, 3
      %p161 = pnand %p159, %p160
      %p162 = pneg %p161
      // Predicated region
      $region9: #{tpu_custom_call.1} parent=5 // pred_check
        _
      $region10: #{tpu_custom_call.1} parent=5 // pred_check_branch
        %164 = sbr.rel (%p161) target = $region12
      $region11: #{tpu_custom_call.1} parent=5 // pred_region
        %s165 = ssub.s32 %s15, 1
        // Predicated region
        $region13: #{tpu_custom_call.1} parent=11 // pred_check
          %p166 = pneg %p62
        $region14: #{tpu_custom_call.1} parent=11 // pred_check_branch
          %168 = sbr.rel (%p166) target = $region16
        $region15: #{tpu_custom_call.1} parent=11 // pred_region
          _
        $region16: #{tpu_custom_call.1} parent=11 // pred_fallthru
          _
        // Predicated region
        $region17: #{tpu_custom_call.1} parent=11 // pred_check
          %p169 = pneg %p83
        $region18: #{tpu_custom_call.1} parent=11 // pred_check_branch
          %171 = sbr.rel (%p169) target = $region20
        $region19: #{tpu_custom_call.1} parent=11 // pred_region
          _
        $region20: #{tpu_custom_call.1} parent=11 // pred_fallthru
          _
        // Predicated region
        $region21: #{tpu_custom_call.1} parent=11 // pred_check
          %p172 = pneg %p104
        $region22: #{tpu_custom_call.1} parent=11 // pred_check_branch
          %174 = sbr.rel (%p172) target = $region24
        $region23: #{tpu_custom_call.1} parent=11 // pred_region
          _
        $region24: #{tpu_custom_call.1} parent=11 // pred_fallthru
          _
        // Predicated region
        $region25: #{tpu_custom_call.1} parent=11 // pred_check
          %p175 = pneg %p125
        $region26: #{tpu_custom_call.1} parent=11 // pred_check_branch
          %177 = sbr.rel (%p175) target = $region28
        $region27: #{tpu_custom_call.1} parent=11 // pred_region
          _
        $region28: #{tpu_custom_call.1} parent=11 // pred_fallthru
          _
      $region12: #{tpu_custom_call.1} parent=5 // pred_fallthru
        _
      %p178 = scmp.lt.s32.totalorder %s15, 2
      // Predicated region
      $region29: #{tpu_custom_call.1} parent=5 // pred_check
        %p179 = pneg %p178
      $region30: #{tpu_custom_call.1} parent=5 // pred_check_branch
        %181 = sbr.rel (%p179) target = $region32
      $region31: #{tpu_custom_call.1} parent=5 // pred_region
        // Predicated region
        $region33: #{tpu_custom_call.1} parent=31 // pred_check
          %p182 = pneg %p35
        $region34: #{tpu_custom_call.1} parent=31 // pred_check_branch
          %184 = sbr.rel (%p182) target = $region36
        $region35: #{tpu_custom_call.1} parent=31 // pred_region
          %s185 = smul.u32 32, %s15
          %p186 = scmp.lt.s32.totalorder %s185, 63
          %s187 = scalar_select %p186, %s185, 63
          %s188 = smul.addr %s187, 8
          %s189 = scalar_lea.vmem %s0, %s188
          %s190 = smul.u32 32, %s15
        $region36: #{tpu_custom_call.1} parent=31 // pred_fallthru
          _
      $region32: #{tpu_custom_call.1} parent=5 // pred_fallthru
        _
      %p191 = scmp.le.s32.totalorder 1, %s15
      %p192 = scmp.lt.s32.totalorder %s15, 3
      %p193 = pnand %p191, %p192
      %p194 = pneg %p193
      // Predicated region
      $region37: #{tpu_custom_call.1} parent=5 // pred_check
        _
      $region38: #{tpu_custom_call.1} parent=5 // pred_check_branch
        %196 = sbr.rel (%p193) target = $region40
      $region39: #{tpu_custom_call.1} parent=5 // pred_region
        %s197 = ssub.s32 %s15, 1
        %s198 = smul.u32 32, %s20
        %p199 = scmp.lt.s32.totalorder %s198, 63
        %s200 = scalar_select %p199, %s198, 63
        %s201 = smul.addr %s200, 8
        %s202 = scalar_lea.vmem %s0, %s201
        %p203 = pneg %p41
        %p204 = pneg %p38
        %p205 = pneg %p62
        %p206 = pneg %p59
        %p207 = pneg %p83
        %p208 = pneg %p80
        %p209 = pneg %p104
        %p210 = pneg %p101
        %p211 = pneg %p125
        %p212 = pneg %p122
        %p213 = pneg %p151
        %p214 = pneg %p148
        %s215 = sand.u32 %s138, 1
        %s216 = scalar_lea.sflag [#allocation4], %s215
        %s217 = sand.u32 %s138, 1
        %s218 = smul.addr %s217, 2
        %s219 = scalar_lea.vmem [#allocation3], %s218
        %s220 = smul.u32 32, %s20
        %p221 = scmp.lt.s32.totalorder %s220, 63
        %s222 = scalar_select %p221, %s220, 63
        %s223 = smul.addr %s222, 8
        %s224 = scalar_lea.vmem %s0, %s223
        %s225 = smul.u32 32, %s20
        %s226 = smul.u32 2, %s20
        %v227 = vld [vmem:[%s224] sm:$0xff]
        %v228 = vld [vmem:[%s224 + $0x8] sm:$0xff]
        %v229 = vld [vmem:[%s224 + $0x10] sm:$0xff]
        %v230 = vld [vmem:[%s224 + $0x18] sm:$0xff]
        %v231 = vld [vmem:[%s224 + $0x20] sm:$0xff]
        %v232 = vld [vmem:[%s224 + $0x28] sm:$0xff]
        %v233 = vld [vmem:[%s224 + $0x30] sm:$0xff]
        %v234 = vld [vmem:[%s224 + $0x38] sm:$0xff]
        %v235 = vld [vmem:[%s224 + $0x40] sm:$0xff]
        %v236 = vld [vmem:[%s224 + $0x48] sm:$0xff]
        %v237 = vld [vmem:[%s224 + $0x50] sm:$0xff]
        %v238 = vld [vmem:[%s224 + $0x58] sm:$0xff]
        %v239 = vld [vmem:[%s224 + $0x60] sm:$0xff]
        %v240 = vld [vmem:[%s224 + $0x68] sm:$0xff]
        %v241 = vld [vmem:[%s224 + $0x70] sm:$0xff]
        %v242 = vld [vmem:[%s224 + $0x78] sm:$0xff]
        %v243 = vld [vmem:[%s224 + $0x80] sm:$0xff]
        %v244 = vld [vmem:[%s224 + $0x88] sm:$0xff]
        %v245 = vld [vmem:[%s224 + $0x90] sm:$0xff]
        %v246 = vld [vmem:[%s224 + $0x98] sm:$0xff]
        %v247 = vld [vmem:[%s224 + $0xa0] sm:$0xff]
        %v248 = vld [vmem:[%s224 + $0xa8] sm:$0xff]
        %v249 = vld [vmem:[%s224 + $0xb0] sm:$0xff]
        %v250 = vld [vmem:[%s224 + $0xb8] sm:$0xff]
        %v251 = vld [vmem:[%s224 + $0xc0] sm:$0xff]
        %v252 = vld [vmem:[%s224 + $0xc8] sm:$0xff]
        %v253 = vld [vmem:[%s224 + $0xd0] sm:$0xff]
        %v254 = vld [vmem:[%s224 + $0xd8] sm:$0xff]
        %v255 = vld [vmem:[%s224 + $0xe0] sm:$0xff]
        %v256 = vld [vmem:[%s224 + $0xe8] sm:$0xff]
        %v257 = vld [vmem:[%s224 + $0xf0] sm:$0xff]
        %v258 = vld [vmem:[%s224 + $0xf8] sm:$0xff]
        %v259 = vld [vmem:[%s1] sm:$0xff]
        %v260 = vld [vmem:[%s1 + $0x8] sm:$0xff]
        %v261 = vld [vmem:[%s1 + $0x10] sm:$0xff]
        %v262 = vld [vmem:[%s1 + $0x18] sm:$0xff]
        %v263 = vld [vmem:[%s2] sm:$0x1]
        %v265 = vlaneseq
        %v266 = vshrl.u32 %v265, 7
        %v267 = vsub.s32 0, %v266
        %v268 = vrot.slane %v263, %v267
        %vm270 = vcmask 261120
        %v272 = vsel %vm270, %v227, 0
        %v275 = vsel %vm270, %v228, 0
        %v278 = vsel %vm270, %v229, 0
        %v281 = vsel %vm270, %v230, 0
        %v284 = vsel %vm270, %v231, 0
        %v287 = vsel %vm270, %v232, 0
        %v290 = vsel %vm270, %v233, 0
        %v293 = vsel %vm270, %v234, 0
        %v296 = vsel %vm270, %v235, 0
        %v299 = vsel %vm270, %v236, 0
        %v302 = vsel %vm270, %v237, 0
        %v305 = vsel %vm270, %v238, 0
        %v308 = vsel %vm270, %v239, 0
        %v311 = vsel %vm270, %v240, 0
        %v314 = vsel %vm270, %v241, 0
        %v317 = vsel %vm270, %v242, 0
        %v320 = vsel %vm270, %v243, 0
        %v323 = vsel %vm270, %v244, 0
        %v326 = vsel %vm270, %v245, 0
        %v329 = vsel %vm270, %v246, 0
        %v332 = vsel %vm270, %v247, 0
        %v335 = vsel %vm270, %v248, 0
        %v338 = vsel %vm270, %v249, 0
        %v341 = vsel %vm270, %v250, 0
        %v344 = vsel %vm270, %v251, 0
        %v347 = vsel %vm270, %v252, 0
        %v350 = vsel %vm270, %v253, 0
        %v353 = vsel %vm270, %v254, 0
        %v356 = vsel %vm270, %v255, 0
        %v359 = vsel %vm270, %v256, 0
        %v362 = vsel %vm270, %v257, 0
        %v365 = vsel %vm270, %v258, 0
        %367 = vmatprep.subr.mxu0 0.0
        %368 = vmatpush1.msra.mxu0 %v259
        %369 = vmatprep.subr.mxu0 0.0
        %370 = vmatpush1.msra.mxu0 %v260
        %371 = vmatprep.subr.mxu0 0.0
        %372 = vmatpush1.msra.mxu0 %v261
        %373 = vmatprep.subr.mxu0 0.0
        %374 = vmatpush1.msra.mxu0 %v262
        %375 = vmatprep.subr.mxu0 0.0
        %376 = vmatpush1.msra.mxu0 0.0
        %377 = vmatprep.subr.mxu0 0.0
        %378 = vmatpush1.msra.mxu0 0.0
        %379 = vmatprep.subr.mxu0 0.0
        %380 = vmatpush1.msra.mxu0 0.0
        %381 = vmatprep.subr.mxu0 0.0
        %382 = vmatpush1.msra.mxu0 0.0
        %383 = vmatprep.subr.mxu0 0.0
        %384 = vmatpush1.msra.mxu0 0.0
        %385 = vmatprep.subr.mxu0 0.0
        %386 = vmatpush1.msra.mxu0 0.0
        %387 = vmatprep.subr.mxu0 0.0
        %388 = vmatpush1.msra.mxu0 0.0
        %389 = vmatprep.subr.mxu0 0.0
        %390 = vmatpush1.msra.mxu0 0.0
        %391 = vmatprep.subr.mxu0 0.0
        %392 = vmatpush1.msra.mxu0 0.0
        %393 = vmatprep.subr.mxu0 0.0
        %394 = vmatpush1.msra.mxu0 0.0
        %395 = vmatprep.subr.mxu0 0.0
        %396 = vmatpush1.msra.mxu0 0.0
        %397 = vmatprep.subr.mxu0 0.0
        %398 = vmatpush1.msra.mxu0 0.0
        %399 = vmatprep.subr.mxu0 0.0
        %400 = vmatpush1.msra.mxu0 0.0
        %401 = vmatprep.subr.mxu0 0.0
        %402 = vmatpush1.msra.mxu0 0.0
        %403 = vmatprep.subr.mxu0 0.0
        %404 = vmatpush1.msra.mxu0 0.0
        %405 = vmatprep.subr.mxu0 0.0
        %406 = vmatpush1.msra.mxu0 0.0
        %407 = vmatprep.subr.mxu0 0.0
        %408 = vmatpush1.msra.mxu0 0.0
        %409 = vmatprep.subr.mxu0 0.0
        %410 = vmatpush1.msra.mxu0 0.0
        %411 = vmatprep.subr.mxu0 0.0
        %412 = vmatpush1.msra.mxu0 0.0
        %413 = vmatprep.subr.mxu0 0.0
        %414 = vmatpush1.msra.mxu0 0.0
        %415 = vmatprep.subr.mxu0 0.0
        %416 = vmatpush1.msra.mxu0 0.0
        %417 = vmatprep.subr.mxu0 0.0
        %418 = vmatpush1.msra.mxu0 0.0
        %419 = vmatprep.subr.mxu0 0.0
        %420 = vmatpush1.msra.mxu0 0.0
        %421 = vmatprep.subr.mxu0 0.0
        %422 = vmatpush1.msra.mxu0 0.0
        %423 = vmatprep.subr.mxu0 0.0
        %424 = vmatpush1.msra.mxu0 0.0
        %425 = vmatprep.subr.mxu0 0.0
        %426 = vmatpush1.msra.mxu0 0.0
        %427 = vmatprep.subr.mxu0 0.0
        %428 = vmatpush1.msra.mxu0 0.0
        %429 = vmatprep.subr.mxu0 0.0
        %430 = vmatpush1.msra.mxu0 0.0
        %431 = vmatprep.mubr.f32.mxu0 0.0
        %432 = vmatmul.mubr.f32.gmra.mrb[0].mxu0 %v272
        %v433 = vpop.f32.mrb[0].mxu0
        %v434 = vadd.f32 %v268, %v433
        %v435 = vpop.f32.mrb[0].mxu0
        %436 = vmatprep.mubr.f32.mxu0 0.0
        %437 = vmatmul.mubr.f32.gmra.mrb[0].mxu0 %v275
        %v438 = vpop.f32.mrb[0].mxu0
        %v439 = vadd.f32 %v268, %v438
        %v440 = vpop.f32.mrb[0].mxu0
        %441 = vmatprep.mubr.f32.mxu0 0.0
        %442 = vmatmul.mubr.f32.gmra.mrb[0].mxu0 %v278
        %v443 = vpop.f32.mrb[0].mxu0
        %v444 = vadd.f32 %v268, %v443
        %v445 = vpop.f32.mrb[0].mxu0
        %446 = vmatprep.mubr.f32.mxu0 0.0
        %447 = vmatmul.mubr.f32.gmra.mrb[0].mxu0 %v281
        %v448 = vpop.f32.mrb[0].mxu0
        %v449 = vadd.f32 %v268, %v448
        %v450 = vpop.f32.mrb[0].mxu0
        %451 = vmatprep.mubr.f32.mxu0 0.0
        %452 = vmatmul.mubr.f32.gmra.mrb[0].mxu0 %v284
        %v453 = vpop.f32.mrb[0].mxu0
        %v454 = vadd.f32 %v268, %v453
        %v455 = vpop.f32.mrb[0].mxu0
        %456 = vmatprep.mubr.f32.mxu0 0.0
        %457 = vmatmul.mubr.f32.gmra.mrb[0].mxu0 %v287
        %v458 = vpop.f32.mrb[0].mxu0
        %v459 = vadd.f32 %v268, %v458
        %v460 = vpop.f32.mrb[0].mxu0
        %461 = vmatprep.mubr.f32.mxu0 0.0
        %462 = vmatmul.mubr.f32.gmra.mrb[0].mxu0 %v290
        %v463 = vpop.f32.mrb[0].mxu0
        %v464 = vadd.f32 %v268, %v463
        %v465 = vpop.f32.mrb[0].mxu0
        %466 = vmatprep.mubr.f32.mxu0 0.0
        %467 = vmatmul.mubr.f32.gmra.mrb[0].mxu0 %v293
        %v468 = vpop.f32.mrb[0].mxu0
        %v469 = vadd.f32 %v268, %v468
        %v470 = vpop.f32.mrb[0].mxu0
        %471 = vmatprep.mubr.f32.mxu0 0.0
        %472 = vmatmul.mubr.f32.gmra.mrb[0].mxu0 %v296
        %v473 = vpop.f32.mrb[0].mxu0
        %v474 = vadd.f32 %v268, %v473
        %v475 = vpop.f32.mrb[0].mxu0
        %476 = vmatprep.mubr.f32.mxu0 0.0
        %477 = vmatmul.mubr.f32.gmra.mrb[0].mxu0 %v299
        %v478 = vpop.f32.mrb[0].mxu0
        %v479 = vadd.f32 %v268, %v478
        %v480 = vpop.f32.mrb[0].mxu0
        %481 = vmatprep.mubr.f32.mxu0 0.0
        %482 = vmatmul.mubr.f32.gmra.mrb[0].mxu0 %v302
        %v483 = vpop.f32.mrb[0].mxu0
        %v484 = vadd.f32 %v268, %v483
        %v485 = vpop.f32.mrb[0].mxu0
        %486 = vmatprep.mubr.f32.mxu0 0.0
        %487 = vmatmul.mubr.f32.gmra.mrb[0].mxu0 %v305
        %v488 = vpop.f32.mrb[0].mxu0
        %v489 = vadd.f32 %v268, %v488
        %v490 = vpop.f32.mrb[0].mxu0
        %491 = vmatprep.mubr.f32.mxu0 0.0
        %492 = vmatmul.mubr.f32.gmra.mrb[0].mxu0 %v308
        %v493 = vpop.f32.mrb[0].mxu0
        %v494 = vadd.f32 %v268, %v493
        %v495 = vpop.f32.mrb[0].mxu0
        %496 = vmatprep.mubr.f32.mxu0 0.0
        %497 = vmatmul.mubr.f32.gmra.mrb[0].mxu0 %v311
        %v498 = vpop.f32.mrb[0].mxu0
        %v499 = vadd.f32 %v268, %v498
        %v500 = vpop.f32.mrb[0].mxu0
        %501 = vmatprep.mubr.f32.mxu0 0.0
        %502 = vmatmul.mubr.f32.gmra.mrb[0].mxu0 %v314
        %v503 = vpop.f32.mrb[0].mxu0
        %v504 = vadd.f32 %v268, %v503
        %v505 = vpop.f32.mrb[0].mxu0
        %506 = vmatprep.mubr.f32.mxu0 0.0
        %507 = vmatmul.mubr.f32.gmra.mrb[0].mxu0 %v317
        %v508 = vpop.f32.mrb[0].mxu0
        %v509 = vadd.f32 %v268, %v508
        %v510 = vpop.f32.mrb[0].mxu0
        %511 = vmatprep.mubr.f32.mxu0 0.0
        %512 = vmatmul.mubr.f32.gmra.mrb[0].mxu0 %v320
        %v513 = vpop.f32.mrb[0].mxu0
        %v514 = vadd.f32 %v268, %v513
        %v515 = vpop.f32.mrb[0].mxu0
        %516 = vmatprep.mubr.f32.mxu0 0.0
        %517 = vmatmul.mubr.f32.gmra.mrb[0].mxu0 %v323
        %v518 = vpop.f32.mrb[0].mxu0
        %v519 = vadd.f32 %v268, %v518
        %v520 = vpop.f32.mrb[0].mxu0
        %521 = vmatprep.mubr.f32.mxu0 0.0
        %522 = vmatmul.mubr.f32.gmra.mrb[0].mxu0 %v326
        %v523 = vpop.f32.mrb[0].mxu0
        %v524 = vadd.f32 %v268, %v523
        %v525 = vpop.f32.mrb[0].mxu0
        %526 = vmatprep.mubr.f32.mxu0 0.0
        %527 = vmatmul.mubr.f32.gmra.mrb[0].mxu0 %v329
        %v528 = vpop.f32.mrb[0].mxu0
        %v529 = vadd.f32 %v268, %v528
        %v530 = vpop.f32.mrb[0].mxu0
        %531 = vmatprep.mubr.f32.mxu0 0.0
        %532 = vmatmul.mubr.f32.gmra.mrb[0].mxu0 %v332
        %v533 = vpop.f32.mrb[0].mxu0
        %v534 = vadd.f32 %v268, %v533
        %v535 = vpop.f32.mrb[0].mxu0
        %536 = vmatprep.mubr.f32.mxu0 0.0
        %537 = vmatmul.mubr.f32.gmra.mrb[0].mxu0 %v335
        %v538 = vpop.f32.mrb[0].mxu0
        %v539 = vadd.f32 %v268, %v538
        %v540 = vpop.f32.mrb[0].mxu0
        %541 = vmatprep.mubr.f32.mxu0 0.0
        %542 = vmatmul.mubr.f32.gmra.mrb[0].mxu0 %v338
        %v543 = vpop.f32.mrb[0].mxu0
        %v544 = vadd.f32 %v268, %v543
        %v545 = vpop.f32.mrb[0].mxu0
        %546 = vmatprep.mubr.f32.mxu0 0.0
        %547 = vmatmul.mubr.f32.gmra.mrb[0].mxu0 %v341
        %v548 = vpop.f32.mrb[0].mxu0
        %v549 = vadd.f32 %v268, %v548
        %v550 = vpop.f32.mrb[0].mxu0
        %551 = vmatprep.mubr.f32.mxu0 0.0
        %552 = vmatmul.mubr.f32.gmra.mrb[0].mxu0 %v344
        %v553 = vpop.f32.mrb[0].mxu0
        %v554 = vadd.f32 %v268, %v553
        %v555 = vpop.f32.mrb[0].mxu0
        %556 = vmatprep.mubr.f32.mxu0 0.0
        %557 = vmatmul.mubr.f32.gmra.mrb[0].mxu0 %v347
        %v558 = vpop.f32.mrb[0].mxu0
        %v559 = vadd.f32 %v268, %v558
        %v560 = vpop.f32.mrb[0].mxu0
        %561 = vmatprep.mubr.f32.mxu0 0.0
        %562 = vmatmul.mubr.f32.gmra.mrb[0].mxu0 %v350
        %v563 = vpop.f32.mrb[0].mxu0
        %v564 = vadd.f32 %v268, %v563
        %v565 = vpop.f32.mrb[0].mxu0
        %566 = vmatprep.mubr.f32.mxu0 0.0
        %567 = vmatmul.mubr.f32.gmra.mrb[0].mxu0 %v353
        %v568 = vpop.f32.mrb[0].mxu0
        %v569 = vadd.f32 %v268, %v568
        %v570 = vpop.f32.mrb[0].mxu0
        %571 = vmatprep.mubr.f32.mxu0 0.0
        %572 = vmatmul.mubr.f32.gmra.mrb[0].mxu0 %v356
        %v573 = vpop.f32.mrb[0].mxu0
        %v574 = vadd.f32 %v268, %v573
        %v575 = vpop.f32.mrb[0].mxu0
        %576 = vmatprep.mubr.f32.mxu0 0.0
        %577 = vmatmul.mubr.f32.gmra.mrb[0].mxu0 %v359
        %v578 = vpop.f32.mrb[0].mxu0
        %v579 = vadd.f32 %v268, %v578
        %v580 = vpop.f32.mrb[0].mxu0
        %581 = vmatprep.mubr.f32.mxu0 0.0
        %582 = vmatmul.mubr.f32.gmra.mrb[0].mxu0 %v362
        %v583 = vpop.f32.mrb[0].mxu0
        %v584 = vadd.f32 %v268, %v583
        %v585 = vpop.f32.mrb[0].mxu0
        %586 = vmatprep.mubr.f32.mxu0 0.0
        %587 = vmatmul.mubr.f32.gmra.mrb[0].mxu0 %v365
        %v588 = vpop.f32.mrb[0].mxu0
        %v589 = vadd.f32 %v268, %v588
        %v590 = vpop.f32.mrb[0].mxu0
        %591 = vdwg.mxu0
        %v592 = vmul.f32 %v434, 0.2
        %v593 = vmul.f32 %v439, 0.2
        %v594 = vmul.f32 %v444, 0.2
        %v595 = vmul.f32 %v449, 0.2
        %v596 = vmul.f32 %v454, 0.2
        %v597 = vmul.f32 %v459, 0.2
        %v598 = vmul.f32 %v464, 0.2
        %v599 = vmul.f32 %v469, 0.2
        %v600 = vmul.f32 %v474, 0.2
        %v601 = vmul.f32 %v479, 0.2
        %v602 = vmul.f32 %v484, 0.2
        %v603 = vmul.f32 %v489, 0.2
        %v604 = vmul.f32 %v494, 0.2
        %v605 = vmul.f32 %v499, 0.2
        %v606 = vmul.f32 %v504, 0.2
        %v607 = vmul.f32 %v509, 0.2
        %v608 = vmul.f32 %v514, 0.2
        %v609 = vmul.f32 %v519, 0.2
        %v610 = vmul.f32 %v524, 0.2
        %v611 = vmul.f32 %v529, 0.2
        %v612 = vmul.f32 %v534, 0.2
        %v613 = vmul.f32 %v539, 0.2
        %v614 = vmul.f32 %v544, 0.2
        %v615 = vmul.f32 %v549, 0.2
        %v616 = vmul.f32 %v554, 0.2
        %v617 = vmul.f32 %v559, 0.2
        %v618 = vmul.f32 %v564, 0.2
        %v619 = vmul.f32 %v569, 0.2
        %v620 = vmul.f32 %v574, 0.2
        %v621 = vmul.f32 %v579, 0.2
        %v622 = vmul.f32 %v584, 0.2
        %v623 = vmul.f32 %v589, 0.2
        %v624 = vmax.f32 %v434, %v592
        %v625 = vmax.f32 %v439, %v593
        %v626 = vmax.f32 %v444, %v594
        %v627 = vmax.f32 %v449, %v595
        %v628 = vmax.f32 %v454, %v596
        %v629 = vmax.f32 %v459, %v597
        %v630 = vmax.f32 %v464, %v598
        %v631 = vmax.f32 %v469, %v599
        %v632 = vmax.f32 %v474, %v600
        %v633 = vmax.f32 %v479, %v601
        %v634 = vmax.f32 %v484, %v602
        %v635 = vmax.f32 %v489, %v603
        %v636 = vmax.f32 %v494, %v604
        %v637 = vmax.f32 %v499, %v605
        %v638 = vmax.f32 %v504, %v606
        %v639 = vmax.f32 %v509, %v607
        %v640 = vmax.f32 %v514, %v608
        %v641 = vmax.f32 %v519, %v609
        %v642 = vmax.f32 %v524, %v610
        %v643 = vmax.f32 %v529, %v611
        %v644 = vmax.f32 %v534, %v612
        %v645 = vmax.f32 %v539, %v613
        %v646 = vmax.f32 %v544, %v614
        %v647 = vmax.f32 %v549, %v615
        %v648 = vmax.f32 %v554, %v616
        %v649 = vmax.f32 %v559, %v617
        %v650 = vmax.f32 %v564, %v618
        %v651 = vmax.f32 %v569, %v619
        %v652 = vmax.f32 %v574, %v620
        %v653 = vmax.f32 %v579, %v621
        %v654 = vmax.f32 %v584, %v622
        %v655 = vmax.f32 %v589, %v623
        %v656 = vld [vmem:[%s3] sm:$0x1]
        %v658 = vlaneseq
        %v659 = vshrl.u32 %v658, 7
        %v660 = vsub.s32 0, %v659
        %v661 = vrot.slane %v656, %v660
        %v663 = vmul.f32 %v624, %v661
        %v664 = vmul.f32 %v625, %v661
        %v665 = vmul.f32 %v626, %v661
        %v666 = vmul.f32 %v627, %v661
        %v667 = vmul.f32 %v628, %v661
        %v668 = vmul.f32 %v629, %v661
        %v669 = vmul.f32 %v630, %v661
        %v670 = vmul.f32 %v631, %v661
        %v671 = vmul.f32 %v632, %v661
        %v672 = vmul.f32 %v633, %v661
        %v673 = vmul.f32 %v634, %v661
        %v674 = vmul.f32 %v635, %v661
        %v675 = vmul.f32 %v636, %v661
        %v676 = vmul.f32 %v637, %v661
        %v677 = vmul.f32 %v638, %v661
        %v678 = vmul.f32 %v639, %v661
        %v679 = vmul.f32 %v640, %v661
        %v680 = vmul.f32 %v641, %v661
        %v681 = vmul.f32 %v642, %v661
        %v682 = vmul.f32 %v643, %v661
        %v683 = vmul.f32 %v644, %v661
        %v684 = vmul.f32 %v645, %v661
        %v685 = vmul.f32 %v646, %v661
        %v686 = vmul.f32 %v647, %v661
        %v687 = vmul.f32 %v648, %v661
        %v688 = vmul.f32 %v649, %v661
        %v689 = vmul.f32 %v650, %v661
        %v690 = vmul.f32 %v651, %v661
        %v691 = vmul.f32 %v652, %v661
        %v692 = vmul.f32 %v653, %v661
        %v693 = vmul.f32 %v654, %v661
        %v694 = vmul.f32 %v655, %v661
        %vm695 = vcmask 523264
        %v696 = vsel %vm695, %v663, 0.0
        %697 = vadd.xlane.f32.xlu0 %v696
        %v698 = vpop.xlane.xlu0 %697
        %v699 = vsel %vm695, %v664, 0.0
        %700 = vadd.xlane.f32.xlu0 %v699
        %v701 = vpop.xlane.xlu0 %700
        %v702 = vsel %vm695, %v665, 0.0
        %703 = vadd.xlane.f32.xlu0 %v702
        %v704 = vpop.xlane.xlu0 %703
        %v705 = vsel %vm695, %v666, 0.0
        %706 = vadd.xlane.f32.xlu0 %v705
        %v707 = vpop.xlane.xlu0 %706
        %v708 = vsel %vm695, %v667, 0.0
        %709 = vadd.xlane.f32.xlu0 %v708
        %v710 = vpop.xlane.xlu0 %709
        %v711 = vsel %vm695, %v668, 0.0
        %712 = vadd.xlane.f32.xlu0 %v711
        %v713 = vpop.xlane.xlu0 %712
        %v714 = vsel %vm695, %v669, 0.0
        %715 = vadd.xlane.f32.xlu0 %v714
        %v716 = vpop.xlane.xlu0 %715
        %v717 = vsel %vm695, %v670, 0.0
        %718 = vadd.xlane.f32.xlu0 %v717
        %v719 = vpop.xlane.xlu0 %718
        %v720 = vsel %vm695, %v671, 0.0
        %721 = vadd.xlane.f32.xlu0 %v720
        %v722 = vpop.xlane.xlu0 %721
        %v723 = vsel %vm695, %v672, 0.0
        %724 = vadd.xlane.f32.xlu0 %v723
        %v725 = vpop.xlane.xlu0 %724
        %v726 = vsel %vm695, %v673, 0.0
        %727 = vadd.xlane.f32.xlu0 %v726
        %v728 = vpop.xlane.xlu0 %727
        %v729 = vsel %vm695, %v674, 0.0
        %730 = vadd.xlane.f32.xlu0 %v729
        %v731 = vpop.xlane.xlu0 %730
        %v732 = vsel %vm695, %v675, 0.0
        %733 = vadd.xlane.f32.xlu0 %v732
        %v734 = vpop.xlane.xlu0 %733
        %v735 = vsel %vm695, %v676, 0.0
        %736 = vadd.xlane.f32.xlu0 %v735
        %v737 = vpop.xlane.xlu0 %736
        %v738 = vsel %vm695, %v677, 0.0
        %739 = vadd.xlane.f32.xlu0 %v738
        %v740 = vpop.xlane.xlu0 %739
        %v741 = vsel %vm695, %v678, 0.0
        %742 = vadd.xlane.f32.xlu0 %v741
        %v743 = vpop.xlane.xlu0 %742
        %v744 = vsel %vm695, %v679, 0.0
        %745 = vadd.xlane.f32.xlu0 %v744
        %v746 = vpop.xlane.xlu0 %745
        %v747 = vsel %vm695, %v680, 0.0
        %748 = vadd.xlane.f32.xlu0 %v747
        %v749 = vpop.xlane.xlu0 %748
        %v750 = vsel %vm695, %v681, 0.0
        %751 = vadd.xlane.f32.xlu0 %v750
        %v752 = vpop.xlane.xlu0 %751
        %v753 = vsel %vm695, %v682, 0.0
        %754 = vadd.xlane.f32.xlu0 %v753
        %v755 = vpop.xlane.xlu0 %754
        %v756 = vsel %vm695, %v683, 0.0
        %757 = vadd.xlane.f32.xlu0 %v756
        %v758 = vpop.xlane.xlu0 %757
        %v759 = vsel %vm695, %v684, 0.0
        %760 = vadd.xlane.f32.xlu0 %v759
        %v761 = vpop.xlane.xlu0 %760
        %v762 = vsel %vm695, %v685, 0.0
        %763 = vadd.xlane.f32.xlu0 %v762
        %v764 = vpop.xlane.xlu0 %763
        %v765 = vsel %vm695, %v686, 0.0
        %766 = vadd.xlane.f32.xlu0 %v765
        %v767 = vpop.xlane.xlu0 %766
        %v768 = vsel %vm695, %v687, 0.0
        %769 = vadd.xlane.f32.xlu0 %v768
        %v770 = vpop.xlane.xlu0 %769
        %v771 = vsel %vm695, %v688, 0.0
        %772 = vadd.xlane.f32.xlu0 %v771
        %v773 = vpop.xlane.xlu0 %772
        %v774 = vsel %vm695, %v689, 0.0
        %775 = vadd.xlane.f32.xlu0 %v774
        %v776 = vpop.xlane.xlu0 %775
        %v777 = vsel %vm695, %v690, 0.0
        %778 = vadd.xlane.f32.xlu0 %v777
        %v779 = vpop.xlane.xlu0 %778
        %v780 = vsel %vm695, %v691, 0.0
        %781 = vadd.xlane.f32.xlu0 %v780
        %v782 = vpop.xlane.xlu0 %781
        %v783 = vsel %vm695, %v692, 0.0
        %784 = vadd.xlane.f32.xlu0 %v783
        %v785 = vpop.xlane.xlu0 %784
        %v786 = vsel %vm695, %v693, 0.0
        %787 = vadd.xlane.f32.xlu0 %v786
        %v788 = vpop.xlane.xlu0 %787
        %v789 = vsel %vm695, %v694, 0.0
        %790 = vadd.xlane.f32.xlu0 %v789
        %v791 = vpop.xlane.xlu0 %790
        %s792 = sld [smem:[#allocation2]]
        %v793 = vstv %s792
        %v794 = vadd.f32 %v698, %v793
        %v795 = vadd.f32 %v701, %v793
        %v796 = vadd.f32 %v704, %v793
        %v797 = vadd.f32 %v707, %v793
        %v798 = vadd.f32 %v710, %v793
        %v799 = vadd.f32 %v713, %v793
        %v800 = vadd.f32 %v716, %v793
        %v801 = vadd.f32 %v719, %v793
        %v802 = vadd.f32 %v722, %v793
        %v803 = vadd.f32 %v725, %v793
        %v804 = vadd.f32 %v728, %v793
        %v805 = vadd.f32 %v731, %v793
        %v806 = vadd.f32 %v734, %v793
        %v807 = vadd.f32 %v737, %v793
        %v808 = vadd.f32 %v740, %v793
        %v809 = vadd.f32 %v743, %v793
        %v810 = vadd.f32 %v746, %v793
        %v811 = vadd.f32 %v749, %v793
        %v812 = vadd.f32 %v752, %v793
        %v813 = vadd.f32 %v755, %v793
        %v814 = vadd.f32 %v758, %v793
        %v815 = vadd.f32 %v761, %v793
        %v816 = vadd.f32 %v764, %v793
        %v817 = vadd.f32 %v767, %v793
        %v818 = vadd.f32 %v770, %v793
        %v819 = vadd.f32 %v773, %v793
        %v820 = vadd.f32 %v776, %v793
        %v821 = vadd.f32 %v779, %v793
        %v822 = vadd.f32 %v782, %v793
        %v823 = vadd.f32 %v785, %v793
        %v824 = vadd.f32 %v788, %v793
        %v825 = vadd.f32 %v791, %v793
        %v826 = vlaneseq
        %v827 = vshrl.u32 %v826, 7
        %v828 = vadd.s32 %v827, 8
        %v829 = vadd.s32 %v827, 16
        %v830 = vadd.s32 %v827, 24
        %v831 = vadd.s32 %v827, 32
        %v832 = vadd.s32 %v827, 40
        %v833 = vadd.s32 %v827, 48
        %v834 = vadd.s32 %v827, 56
        %v835 = vadd.s32 %v827, 64
        %v836 = vadd.s32 %v827, 72
        %v837 = vadd.s32 %v827, 80
        %v838 = vadd.s32 %v827, 88
        %v839 = vadd.s32 %v827, 96
        %v840 = vadd.s32 %v827, 104
        %v841 = vadd.s32 %v827, 112
        %v842 = vadd.s32 %v827, 120
        %v843 = vlaneseq
        %v844 = vand.u32 %v843, 127
        %vm845 = vcmp.eq.s32.totalorder %v827, %v844
        %vm846 = vcmp.eq.s32.totalorder %v828, %v844
        %vm847 = vcmp.eq.s32.totalorder %v829, %v844
        %vm848 = vcmp.eq.s32.totalorder %v830, %v844
        %vm849 = vcmp.eq.s32.totalorder %v831, %v844
        %vm850 = vcmp.eq.s32.totalorder %v832, %v844
        %vm851 = vcmp.eq.s32.totalorder %v833, %v844
        %vm852 = vcmp.eq.s32.totalorder %v834, %v844
        %vm853 = vcmp.eq.s32.totalorder %v835, %v844
        %vm854 = vcmp.eq.s32.totalorder %v836, %v844
        %vm855 = vcmp.eq.s32.totalorder %v837, %v844
        %vm856 = vcmp.eq.s32.totalorder %v838, %v844
        %vm857 = vcmp.eq.s32.totalorder %v839, %v844
        %vm858 = vcmp.eq.s32.totalorder %v840, %v844
        %vm859 = vcmp.eq.s32.totalorder %v841, %v844
        %vm860 = vcmp.eq.s32.totalorder %v842, %v844
        %v861 = vsel %vm845, 1, 0
        %v862 = vsel %vm846, 1, 0
        %v863 = vsel %vm847, 1, 0
        %v864 = vsel %vm848, 1, 0
        %v865 = vsel %vm849, 1, 0
        %v866 = vsel %vm850, 1, 0
        %v867 = vsel %vm851, 1, 0
        %v868 = vsel %vm852, 1, 0
        %v869 = vsel %vm853, 1, 0
        %v870 = vsel %vm854, 1, 0
        %v871 = vsel %vm855, 1, 0
        %v872 = vsel %vm856, 1, 0
        %v873 = vsel %vm857, 1, 0
        %v874 = vsel %vm858, 1, 0
        %v875 = vsel %vm859, 1, 0
        %v876 = vsel %vm860, 1, 0
        %v877 = vcvt.s32.f32 %v861
        %v878 = vcvt.s32.f32 %v862
        %v879 = vcvt.s32.f32 %v863
        %v880 = vcvt.s32.f32 %v864
        %v881 = vcvt.s32.f32 %v865
        %v882 = vcvt.s32.f32 %v866
        %v883 = vcvt.s32.f32 %v867
        %v884 = vcvt.s32.f32 %v868
        %v885 = vcvt.s32.f32 %v869
        %v886 = vcvt.s32.f32 %v870
        %v887 = vcvt.s32.f32 %v871
        %v888 = vcvt.s32.f32 %v872
        %v889 = vcvt.s32.f32 %v873
        %v890 = vcvt.s32.f32 %v874
        %v891 = vcvt.s32.f32 %v875
        %v892 = vcvt.s32.f32 %v876
        %v893 = vmul.f32 %v794, %v877
        %v894 = vmul.f32 %v795, %v878
        %v895 = vmul.f32 %v796, %v879
        %v896 = vmul.f32 %v797, %v880
        %v897 = vmul.f32 %v798, %v881
        %v898 = vmul.f32 %v799, %v882
        %v899 = vmul.f32 %v800, %v883
        %v900 = vmul.f32 %v801, %v884
        %v901 = vmul.f32 %v802, %v885
        %v902 = vmul.f32 %v803, %v886
        %v903 = vmul.f32 %v804, %v887
        %v904 = vmul.f32 %v805, %v888
        %v905 = vmul.f32 %v806, %v889
        %v906 = vmul.f32 %v807, %v890
        %v907 = vmul.f32 %v808, %v891
        %v908 = vmul.f32 %v809, %v892
        %v909 = vadd.f32 %v893, %v894
        %v910 = vadd.f32 %v909, %v895
        %v911 = vadd.f32 %v910, %v896
        %v912 = vadd.f32 %v911, %v897
        %v913 = vadd.f32 %v912, %v898
        %v914 = vadd.f32 %v913, %v899
        %v915 = vadd.f32 %v914, %v900
        %v916 = vadd.f32 %v915, %v901
        %v917 = vadd.f32 %v916, %v902
        %v918 = vadd.f32 %v917, %v903
        %v919 = vadd.f32 %v918, %v904
        %v920 = vadd.f32 %v919, %v905
        %v921 = vadd.f32 %v920, %v906
        %v922 = vadd.f32 %v921, %v907
        %v923 = vadd.f32 %v922, %v908
        %v924 = vrot.slane %v923, 4
        %v925 = vadd.f32 %v923, %v924
        %v926 = vrot.slane %v925, 2
        %v927 = vadd.f32 %v925, %v926
        %v928 = vrot.slane %v927, 1
        %v929 = vadd.f32 %v927, %v928
        %v930 = vlaneseq
        %vm931 = vcmp.ge.s32.totalorder %v930, 0
        %vm932 = vcmp.lt.s32.totalorder %v930, 128
        %vm933 = vmand %vm931, %vm932
        %934 = vst.msk [vmem:[%s219] sm:$0x1] %vm933, %v929
        %v935 = vmul.f32 %v810, %v877
        %v936 = vmul.f32 %v811, %v878
        %v937 = vmul.f32 %v812, %v879
        %v938 = vmul.f32 %v813, %v880
        %v939 = vmul.f32 %v814, %v881
        %v940 = vmul.f32 %v815, %v882
        %v941 = vmul.f32 %v816, %v883
        %v942 = vmul.f32 %v817, %v884
        %v943 = vmul.f32 %v818, %v885
        %v944 = vmul.f32 %v819, %v886
        %v945 = vmul.f32 %v820, %v887
        %v946 = vmul.f32 %v821, %v888
        %v947 = vmul.f32 %v822, %v889
        %v948 = vmul.f32 %v823, %v890
        %v949 = vmul.f32 %v824, %v891
        %v950 = vmul.f32 %v825, %v892
        %v951 = vadd.f32 %v935, %v936
        %v952 = vadd.f32 %v951, %v937
        %v953 = vadd.f32 %v952, %v938
        %v954 = vadd.f32 %v953, %v939
        %v955 = vadd.f32 %v954, %v940
        %v956 = vadd.f32 %v955, %v941
        %v957 = vadd.f32 %v956, %v942
        %v958 = vadd.f32 %v957, %v943
        %v959 = vadd.f32 %v958, %v944
        %v960 = vadd.f32 %v959, %v945
        %v961 = vadd.f32 %v960, %v946
        %v962 = vadd.f32 %v961, %v947
        %v963 = vadd.f32 %v962, %v948
        %v964 = vadd.f32 %v963, %v949
        %v965 = vadd.f32 %v964, %v950
        %v966 = vrot.slane %v965, 4
        %v967 = vadd.f32 %v965, %v966
        %v968 = vrot.slane %v967, 2
        %v969 = vadd.f32 %v967, %v968
        %v970 = vrot.slane %v969, 1
        %v971 = vadd.f32 %v969, %v970
        %972 = vst.msk [vmem:[%s219 + $0x1] sm:$0x1] %vm933, %v971
        %s973 = sand.u32 %s138, 1
        %s974 = scalar_lea.sflag [#allocation4], %s973
        %s975 = sand.u32 %s138, 1
        %s976 = smul.addr %s975, 2
        %s977 = scalar_lea.vmem [#allocation3], %s976
        // Predicated region
        $region41: #{tpu_custom_call.1} parent=39 // pred_check
          %p978 = pneg %p148
        $region42: #{tpu_custom_call.1} parent=39 // pred_check_branch
          %980 = sbr.rel (%p978) target = $region44
        $region43: #{tpu_custom_call.1} parent=39 // pred_region
          %s981 = smul.u32 2, %s20
          %s983 = ssub.s32 32, 32
          %984 = vsyncadd %s974, %s983
          %s985 = smul.addr %s981, 16
          %s986 = scalar_lea.hbm %s5, %s985
          %s988 = sshll.u32 %s977, 4
          %s989 = int_to_ptr.vmem [resolvable:$true] %s988
          %991 = dma.vmem_to_hbm [thread:$0]  %s989, 32, %s986, %s974
        $region44: #{tpu_custom_call.1} parent=39 // pred_fallthru
          _
      $region40: #{tpu_custom_call.1} parent=5 // pred_fallthru
        _
      %p992 = scmp.le.s32.totalorder 2, %s15
      // Predicated region
      $region45: #{tpu_custom_call.1} parent=5 // pred_check
        %p993 = pneg %p992
      $region46: #{tpu_custom_call.1} parent=5 // pred_check_branch
        %995 = sbr.rel (%p993) target = $region48
      $region47: #{tpu_custom_call.1} parent=5 // pred_region
        %s996 = ssub.s32 %s15, 2
        // Predicated region
        $region49: #{tpu_custom_call.1} parent=47 // pred_check
          %p997 = pneg %p154
        $region50: #{tpu_custom_call.1} parent=47 // pred_check_branch
          %999 = sbr.rel (%p997) target = $region52
        $region51: #{tpu_custom_call.1} parent=47 // pred_region
          %s1000 = sand.u32 %s139, 1
          %s1001 = scalar_lea.sflag [#allocation4], %s1000
          %s1002 = sand.u32 %s139, 1
          %s1003 = smul.addr %s1002, 2
          %s1004 = scalar_lea.vmem [#allocation3], %s1003
          %1005 = dma.done %s1001, 32
        $region52: #{tpu_custom_call.1} parent=47 // pred_fallthru
          _
      $region48: #{tpu_custom_call.1} parent=5 // pred_fallthru
        _
    $region6: #{tpu_custom_call.1} parent=1 // loop_footer
      %s19 = sadd.s32 1, %s15
    $region7: #{tpu_custom_call.1} parent=1 // loop_footer_branch
      %14 = sbr.rel target = $region3
    $region8: #{tpu_custom_call.1} parent=1 // loop_exit
      _
    %1006 = vsyncpa [#allocation4], 1
    %s1007 = scalar_lea.sflag [#allocation4], 1
    %1008 = vsyncpa %s1007, 1

</llo_original>
